<compile_context>
chip_gen: v6e
topology: v6e:2x2x1
jax: 0.10.0
libtpu: 0.0.40
codegen_flags: <defaults>
</compile_context>

<pallas_src>
import functools

import jax
import jax.numpy as jnp
from jax.experimental import pallas as pl
from jax.experimental.pallas import tpu as pltpu


def _round_up(n, m):
    return ((n + m - 1) // m) * m


def mlp_kernel(x_ref, w1_ref, b1_ref, w2_ref, b2_ref, w3_ref, b3_ref, o_ref):
    # fc1 + relu (bf16 inputs, f32 accumulation on the MXU)
    h1 = jnp.dot(x_ref[...], w1_ref[...], preferred_element_type=jnp.float32)
    h1 = jnp.maximum(h1 + b1_ref[...], 0.0)
    # fc2 + relu
    h2 = jnp.dot(h1.astype(jnp.bfloat16), w2_ref[...],
                 preferred_element_type=jnp.float32)
    h2 = jnp.maximum(h2 + b2_ref[...], 0.0)
    # fc3 (no activation)
    o = jnp.dot(h2.astype(jnp.bfloat16), w3_ref[...],
                preferred_element_type=jnp.float32)
    o_ref[...] = (o + b3_ref[...]).astype(o_ref.dtype)


@functools.partial(jax.jit, static_argnames=("tb",))
def mlp_forward(x, params, tb=256):
    """x: (B, 1, 28, 28) NCHW float32. Returns (B, 10) float32."""
    w1, b1, w2, b2, w3, b3 = params
    B = x.shape[0]
    x2d = x.reshape(B, 28 * 28)  # matches torch x.view(-1, 784)

    in_dim, h1_dim = w1.shape
    _, h2_dim = w2.shape
    _, out_dim = w3.shape

    # bf16 for the MXU / DMA-heavy operands; biases stay f32.
    x2d = x2d.astype(jnp.bfloat16)
    w1b = w1.astype(jnp.bfloat16)
    w2b = w2.astype(jnp.bfloat16)
    w3b = w3.astype(jnp.bfloat16)

    # Batch tile: multiple of 8 (sublane), capped at `tb` (default 256 to fill
    # the v6e/v7x 256-wide MXU). Pad B up to a multiple of TB.
    TB = min(tb, _round_up(B, 8))
    B_pad = _round_up(B, TB)
    if B_pad != B:
        x2d = jnp.pad(x2d, ((0, B_pad - B), (0, 0)))
    grid = (B_pad // TB,)

    resident = lambda shape: pl.BlockSpec(shape, lambda i: (0,) * len(shape))

    flops = 2 * B_pad * (in_dim * h1_dim + h1_dim * h2_dim + h2_dim * out_dim)
    bytes_accessed = (
        x2d.size * 2                                     # bf16 input
        + (w1b.size + w2b.size + w3b.size) * 2           # bf16 weights
        + (b1.size + b2.size + b3.size) * 4              # f32 biases
        + B_pad * out_dim * 4                            # f32 output
    )

    out = pl.pallas_call(
        mlp_kernel,
        out_shape=jax.ShapeDtypeStruct((B_pad, out_dim), jnp.float32),
        grid_spec=pltpu.PrefetchScalarGridSpec(
            num_scalar_prefetch=0,
            grid=grid,
            in_specs=[
                pl.BlockSpec((TB, in_dim), lambda i: (i, 0)),  # x tile (pipelined)
                resident((in_dim, h1_dim)),                    # w1 (VMEM-resident)
                resident((1, h1_dim)),                         # b1
                resident((h1_dim, h2_dim)),                    # w2
                resident((1, h2_dim)),                         # b2
                resident((h2_dim, out_dim)),                   # w3
                resident((1, out_dim)),                        # b3
            ],
            out_specs=pl.BlockSpec((TB, out_dim), lambda i: (i, 0)),
        ),
        compiler_params=pltpu.CompilerParams(
            dimension_semantics=("parallel",),  # v7x: shard batch tiles over 2 TCs
        ),
        cost_estimate=pl.CostEstimate(
            flops=flops, transcendentals=0, bytes_accessed=bytes_accessed
        ),
    )(x2d, w1b, b1, w2b, b2, w3b, b3)

    return out[:B]


def init_params(key, input_size=28 * 28, hidden_layers=(128, 64), output_size=10):
    """Deterministic init mimicking PyTorch nn.Linear default (U(-1/sqrt(fan_in), +))."""
    sizes = [input_size, hidden_layers[0], hidden_layers[1], output_size]
    params = []
    keys = jax.random.split(key, 2 * (len(sizes) - 1))
    for li, (fan_in, fan_out) in enumerate(zip(sizes[:-1], sizes[1:])):
        bound = 1.0 / jnp.sqrt(float(fan_in))
        w = jax.random.uniform(
            keys[2 * li], (fan_in, fan_out), jnp.float32, -bound, bound
        )
        b = jax.random.uniform(
            keys[2 * li + 1], (1, fan_out), jnp.float32, -bound, bound
        )
        params.extend([w, b])
    return tuple(params)


def _reference(x, params):
    """Plain-JAX reference using the same bf16 operand rounding as the kernel."""
    w1, b1, w2, b2, w3, b3 = params
    bf = lambda a: a.astype(jnp.bfloat16).astype(jnp.float32)
    B = x.shape[0]
    h = bf(x.reshape(B, 28 * 28))
    h = jnp.maximum(h @ bf(w1) + b1, 0.0)
    h = jnp.maximum(bf(h) @ bf(w2) + b2, 0.0)
    return bf(h) @ bf(w3) + b3


if __name__ == "__main__":
    key = jax.random.PRNGKey(0)
    k_x, k_p = jax.random.split(key)
    params = init_params(k_p)

    # Small batch of MNIST-shaped inputs (B, 1, 28, 28), NCHW.
    B = 2
    x = jax.random.normal(k_x, (B, 1, 28, 28), dtype=jnp.float32)
    out = jax.block_until_ready(mlp_forward(x, params))
    ref = _reference(x, params)
    assert out.shape == (B, 10), out.shape
    assert jnp.allclose(out, ref, atol=2e-2, rtol=2e-2), "mismatch vs reference (B=2)"

    # Exercise the multi-tile + padding path (B not a multiple of the tile).
    B2 = 130
    x2 = jax.random.normal(jax.random.PRNGKey(1), (B2, 1, 28, 28), dtype=jnp.float32)
    out2 = jax.block_until_ready(mlp_forward(x2, params, tb=64))
    ref2 = _reference(x2, params)
    assert out2.shape == (B2, 10), out2.shape
    assert jnp.allclose(out2, ref2, atol=2e-2, rtol=2e-2), "mismatch vs reference (B=130)"

    print("KERNEL_OK")
</pallas_src>

<mosaic_0001>
module attributes {stable_mosaic.version = 11 : i64} {
  func.func @mlp_kernel(%arg0: i32, %arg1: memref<8x784xbf16, #tpu.memory_space<vmem>>, %arg2: memref<784x128xbf16, #tpu.memory_space<vmem>>, %arg3: memref<1x128xf32, #tpu.memory_space<vmem>>, %arg4: memref<128x64xbf16, #tpu.memory_space<vmem>>, %arg5: memref<1x64xf32, #tpu.memory_space<vmem>>, %arg6: memref<64x10xbf16, #tpu.memory_space<vmem>>, %arg7: memref<1x10xf32, #tpu.memory_space<vmem>>, %arg8: memref<8x10xf32, #tpu.memory_space<vmem>>) attributes {dimension_semantics = [#tpu.dimension_semantics<parallel>], iteration_bounds = array<i64: 1>, scalar_prefetch = 0 : i64, scratch_operands = 0 : i64, tpu.core_type = #tpu.core_type<tc>, window_params = [{transform_indices = @transform_0, window_bounds = array<i64: 8, 784>}, {pipeline_mode = #tpu.pipeline_mode<synchronous>, transform_indices = @transform_1, window_bounds = array<i64: 784, 128>}, {pipeline_mode = #tpu.pipeline_mode<synchronous>, transform_indices = @transform_2, window_bounds = array<i64: 1, 128>}, {pipeline_mode = #tpu.pipeline_mode<synchronous>, transform_indices = @transform_3, window_bounds = array<i64: 128, 64>}, {pipeline_mode = #tpu.pipeline_mode<synchronous>, transform_indices = @transform_4, window_bounds = array<i64: 1, 64>}, {pipeline_mode = #tpu.pipeline_mode<synchronous>, transform_indices = @transform_5, window_bounds = array<i64: 64, 10>}, {pipeline_mode = #tpu.pipeline_mode<synchronous>, transform_indices = @transform_6, window_bounds = array<i64: 1, 10>}, {transform_indices = @transform_7, window_bounds = array<i64: 8, 10>}]} {
    %c0 = arith.constant 0 : index
    %c0_0 = arith.constant 0 : index
    %0 = vector.load %arg1[%c0, %c0_0] : memref<8x784xbf16, #tpu.memory_space<vmem>>, vector<8x784xbf16>
    %c0_1 = arith.constant 0 : index
    %c0_2 = arith.constant 0 : index
    %1 = vector.load %arg2[%c0_1, %c0_2] : memref<784x128xbf16, #tpu.memory_space<vmem>>, vector<784x128xbf16>
    %cst = arith.constant dense<0.000000e+00> : vector<8x128xf32>
    %2 = tpu.matmul %0, %1, %cst {dimension_numbers = #tpu.dot_dimension_numbers<[1], [0], [0], [1], [0, 0, 1, 1], [], []>} : vector<8x784xbf16>, vector<784x128xbf16>, vector<8x128xf32> -> vector<8x128xf32>
    %c0_3 = arith.constant 0 : index
    %c0_4 = arith.constant 0 : index
    %3 = vector.load %arg3[%c0_3, %c0_4] : memref<1x128xf32, #tpu.memory_space<vmem>>, vector<1x128xf32>
    %4 = vector.broadcast %3 : vector<1x128xf32> to vector<8x128xf32>
    %5 = arith.addf %2, %4 : vector<8x128xf32>
    %cst_5 = arith.constant 0.000000e+00 : f32
    %6 = vector.broadcast %cst_5 : f32 to vector<8x128xf32>
    %7 = arith.maximumf %5, %6 : vector<8x128xf32>
    %8 = arith.truncf %7 : vector<8x128xf32> to vector<8x128xbf16>
    %c0_6 = arith.constant 0 : index
    %c0_7 = arith.constant 0 : index
    %9 = vector.load %arg4[%c0_6, %c0_7] : memref<128x64xbf16, #tpu.memory_space<vmem>>, vector<128x64xbf16>
    %cst_8 = arith.constant dense<0.000000e+00> : vector<8x64xf32>
    %10 = tpu.matmul %8, %9, %cst_8 {dimension_numbers = #tpu.dot_dimension_numbers<[1], [0], [0], [1], [0, 0, 1, 1], [], []>} : vector<8x128xbf16>, vector<128x64xbf16>, vector<8x64xf32> -> vector<8x64xf32>
    %c0_9 = arith.constant 0 : index
    %c0_10 = arith.constant 0 : index
    %11 = vector.load %arg5[%c0_9, %c0_10] : memref<1x64xf32, #tpu.memory_space<vmem>>, vector<1x64xf32>
    %12 = vector.broadcast %11 : vector<1x64xf32> to vector<8x64xf32>
    %13 = arith.addf %10, %12 : vector<8x64xf32>
    %cst_11 = arith.constant 0.000000e+00 : f32
    %14 = vector.broadcast %cst_11 : f32 to vector<8x64xf32>
    %15 = arith.maximumf %13, %14 : vector<8x64xf32>
    %16 = arith.truncf %15 : vector<8x64xf32> to vector<8x64xbf16>
    %c0_12 = arith.constant 0 : index
    %c0_13 = arith.constant 0 : index
    %17 = vector.load %arg6[%c0_12, %c0_13] : memref<64x10xbf16, #tpu.memory_space<vmem>>, vector<64x10xbf16>
    %cst_14 = arith.constant dense<0.000000e+00> : vector<8x10xf32>
    %18 = tpu.matmul %16, %17, %cst_14 {dimension_numbers = #tpu.dot_dimension_numbers<[1], [0], [0], [1], [0, 0, 1, 1], [], []>} : vector<8x64xbf16>, vector<64x10xbf16>, vector<8x10xf32> -> vector<8x10xf32>
    %c0_15 = arith.constant 0 : index
    %c0_16 = arith.constant 0 : index
    %19 = vector.load %arg7[%c0_15, %c0_16] : memref<1x10xf32, #tpu.memory_space<vmem>>, vector<1x10xf32>
    %20 = vector.broadcast %19 : vector<1x10xf32> to vector<8x10xf32>
    %21 = arith.addf %18, %20 : vector<8x10xf32>
    %c0_17 = arith.constant 0 : index
    %c0_18 = arith.constant 0 : index
    %22 = vector.load %arg8[%c0_17, %c0_18] : memref<8x10xf32, #tpu.memory_space<vmem>>, vector<8x10xf32>
    tpu.vector_store %arg8[%c0_17, %c0_18], %21 {strides = array<i32>} : memref<8x10xf32, #tpu.memory_space<vmem>>, vector<8x10xf32>,
    return
  }
  func.func @transform_0(%arg0: i32) -> (i32, i32) {
    %c0_i32 = arith.constant 0 : i32
    %c0_i32_0 = arith.constant 0 : i32
    return %arg0, %c0_i32 : i32, i32
  }
  func.func @transform_1(%arg0: i32) -> (i32, i32) {
    %c0_i32 = arith.constant 0 : i32
    %c0_i32_0 = arith.constant 0 : i32
    %c0_i32_1 = arith.constant 0 : i32
    return %c0_i32, %c0_i32_0 : i32, i32
  }
  func.func @transform_2(%arg0: i32) -> (i32, i32) {
    %c0_i32 = arith.constant 0 : i32
    %c0_i32_0 = arith.constant 0 : i32
    %c0_i32_1 = arith.constant 0 : i32
    return %c0_i32, %c0_i32_0 : i32, i32
  }
  func.func @transform_3(%arg0: i32) -> (i32, i32) {
    %c0_i32 = arith.constant 0 : i32
    %c0_i32_0 = arith.constant 0 : i32
    %c0_i32_1 = arith.constant 0 : i32
    return %c0_i32, %c0_i32_0 : i32, i32
  }
  func.func @transform_4(%arg0: i32) -> (i32, i32) {
    %c0_i32 = arith.constant 0 : i32
    %c0_i32_0 = arith.constant 0 : i32
    %c0_i32_1 = arith.constant 0 : i32
    return %c0_i32, %c0_i32_0 : i32, i32
  }
  func.func @transform_5(%arg0: i32) -> (i32, i32) {
    %c0_i32 = arith.constant 0 : i32
    %c0_i32_0 = arith.constant 0 : i32
    %c0_i32_1 = arith.constant 0 : i32
    return %c0_i32, %c0_i32_0 : i32, i32
  }
  func.func @transform_6(%arg0: i32) -> (i32, i32) {
    %c0_i32 = arith.constant 0 : i32
    %c0_i32_0 = arith.constant 0 : i32
    %c0_i32_1 = arith.constant 0 : i32
    return %c0_i32, %c0_i32_0 : i32, i32
  }
  func.func @transform_7(%arg0: i32) -> (i32, i32) {
    %c0_i32 = arith.constant 0 : i32
    %c0_i32_0 = arith.constant 0 : i32
    return %arg0, %c0_i32 : i32, i32
  }
}

</mosaic_0001>

<llo_original>
// kernel: mlp_forward.1
$region0: #{mlp_forward.1}
  #allocation0 [shape = 'u32[]', space=smem, size = 0x4, offset = 0x4, fixed_abs, tag = 'smem constant byte address 0x4 - core index']
  #allocation1 [shape = 'u32[144,128]{1,0:T(1,128)}', space=vmem, size = 0x12000, scoped, tag = 'internal scratch']
  %s0 = inlined_call_operand.vmem [shape: bf16[8,784], index: 0, kind: input, shape index: {}]
  %s1 = inlined_call_operand.vmem [shape: bf16[784,128], index: 1, kind: input, shape index: {}]
  %s2 = inlined_call_operand.vmem [shape: f32[1,128], index: 2, kind: input, shape index: {}]
  %s3 = inlined_call_operand.vmem [shape: bf16[128,64], index: 3, kind: input, shape index: {}]
  %s4 = inlined_call_operand.vmem [shape: f32[1,64], index: 4, kind: input, shape index: {}]
  %s5 = inlined_call_operand.vmem [shape: bf16[64,10], index: 5, kind: input, shape index: {}]
  %s6 = inlined_call_operand.vmem [shape: f32[1,10], index: 6, kind: input, shape index: {}]
  %s7 = inlined_call_operand.vmem [shape: f32[8,10], index: 7, kind: output, shape index: {}]
  %s8 = sld [smem:[#allocation0]]
  $region38: #{mlp_forward.1} parent=0
    _
  %s10 = ssub.s32 1, %s8
  %s11 = scalar_select 0, %s10, %s8
  // Predicated region
  $region2: #{mlp_forward.1} parent=0 // pred_check
    _
  $region3: #{mlp_forward.1} parent=0 // pred_check_branch
    %13 = sbr.rel (0) target = $region5
  $region4: #{mlp_forward.1} parent=0 // pred_region
    _
  $region5: #{mlp_forward.1} parent=0 // pred_fallthru
    _
  // Predicated region
  $region6: #{mlp_forward.1} parent=0 // pred_check
    _
  $region7: #{mlp_forward.1} parent=0 // pred_check_branch
    %15 = sbr.rel (0) target = $region9
  $region8: #{mlp_forward.1} parent=0 // pred_region
    _
  $region9: #{mlp_forward.1} parent=0 // pred_fallthru
    _
  // Predicated region
  $region10: #{mlp_forward.1} parent=0 // pred_check
    _
  $region11: #{mlp_forward.1} parent=0 // pred_check_branch
    %17 = sbr.rel (0) target = $region13
  $region12: #{mlp_forward.1} parent=0 // pred_region
    _
  $region13: #{mlp_forward.1} parent=0 // pred_fallthru
    _
  // Predicated region
  $region14: #{mlp_forward.1} parent=0 // pred_check
    _
  $region15: #{mlp_forward.1} parent=0 // pred_check_branch
    %19 = sbr.rel (0) target = $region17
  $region16: #{mlp_forward.1} parent=0 // pred_region
    _
  $region17: #{mlp_forward.1} parent=0 // pred_fallthru
    _
  // Predicated region
  $region18: #{mlp_forward.1} parent=0 // pred_check
    _
  $region19: #{mlp_forward.1} parent=0 // pred_check_branch
    %21 = sbr.rel (0) target = $region21
  $region20: #{mlp_forward.1} parent=0 // pred_region
    _
  $region21: #{mlp_forward.1} parent=0 // pred_fallthru
    _
  // Predicated region
  $region22: #{mlp_forward.1} parent=0 // pred_check
    _
  $region23: #{mlp_forward.1} parent=0 // pred_check_branch
    %23 = sbr.rel (0) target = $region25
  $region24: #{mlp_forward.1} parent=0 // pred_region
    _
  $region25: #{mlp_forward.1} parent=0 // pred_fallthru
    _
  // Predicated region
  $region26: #{mlp_forward.1} parent=0 // pred_check
    _
  $region27: #{mlp_forward.1} parent=0 // pred_check_branch
    %25 = sbr.rel (0) target = $region29
  $region28: #{mlp_forward.1} parent=0 // pred_region
    _
  $region29: #{mlp_forward.1} parent=0 // pred_fallthru
    _
  %v27 = vld [vmem:[%s0] sm:$0xff]
  %v28 = vld [vmem:[%s0 + $0x8] sm:$0xff]
  %v29 = vld [vmem:[%s0 + $0x10] sm:$0xff]
  %v30 = vld [vmem:[%s0 + $0x18] sm:$0xf]
  %v31 = vld [vmem:[%s1] sm:$0xf]
  %v32 = vld [vmem:[%s1 + $0x4] sm:$0xf]
  %v33 = vld [vmem:[%s1 + $0x8] sm:$0xf]
  %v34 = vld [vmem:[%s1 + $0xc] sm:$0xf]
  %v35 = vld [vmem:[%s1 + $0x10] sm:$0xf]
  %v36 = vld [vmem:[%s1 + $0x14] sm:$0xf]
  %v37 = vld [vmem:[%s1 + $0x18] sm:$0xf]
  %v38 = vld [vmem:[%s1 + $0x1c] sm:$0xf]
  %v39 = vld [vmem:[%s1 + $0x20] sm:$0xf]
  %v40 = vld [vmem:[%s1 + $0x24] sm:$0xf]
  %v41 = vld [vmem:[%s1 + $0x28] sm:$0xf]
  %v42 = vld [vmem:[%s1 + $0x2c] sm:$0xf]
  %v43 = vld [vmem:[%s1 + $0x30] sm:$0xf]
  %v44 = vld [vmem:[%s1 + $0x34] sm:$0xf]
  %v45 = vld [vmem:[%s1 + $0x38] sm:$0xf]
  %v46 = vld [vmem:[%s1 + $0x3c] sm:$0xf]
  %v47 = vld [vmem:[%s1 + $0x40] sm:$0xf]
  %v48 = vld [vmem:[%s1 + $0x44] sm:$0xf]
  %v49 = vld [vmem:[%s1 + $0x48] sm:$0xf]
  %v50 = vld [vmem:[%s1 + $0x4c] sm:$0xf]
  %v51 = vld [vmem:[%s1 + $0x50] sm:$0xf]
  %v52 = vld [vmem:[%s1 + $0x54] sm:$0xf]
  %v53 = vld [vmem:[%s1 + $0x58] sm:$0xf]
  %v54 = vld [vmem:[%s1 + $0x5c] sm:$0xf]
  %v55 = vld [vmem:[%s1 + $0x60] sm:$0xf]
  %v56 = vld [vmem:[%s1 + $0x64] sm:$0xf]
  %v57 = vld [vmem:[%s1 + $0x68] sm:$0xf]
  %v58 = vld [vmem:[%s1 + $0x6c] sm:$0xf]
  %v59 = vld [vmem:[%s1 + $0x70] sm:$0xf]
  %v60 = vld [vmem:[%s1 + $0x74] sm:$0xf]
  %v61 = vld [vmem:[%s1 + $0x78] sm:$0xf]
  %v62 = vld [vmem:[%s1 + $0x7c] sm:$0xf]
  %v63 = vld [vmem:[%s1 + $0x80] sm:$0xf]
  %v64 = vld [vmem:[%s1 + $0x84] sm:$0xf]
  %v65 = vld [vmem:[%s1 + $0x88] sm:$0xf]
  %v66 = vld [vmem:[%s1 + $0x8c] sm:$0xf]
  %v67 = vld [vmem:[%s1 + $0x90] sm:$0xf]
  %v68 = vld [vmem:[%s1 + $0x94] sm:$0xf]
  %v69 = vld [vmem:[%s1 + $0x98] sm:$0xf]
  %v70 = vld [vmem:[%s1 + $0x9c] sm:$0xf]
  %v71 = vld [vmem:[%s1 + $0xa0] sm:$0xf]
  %v72 = vld [vmem:[%s1 + $0xa4] sm:$0xf]
  %v73 = vld [vmem:[%s1 + $0xa8] sm:$0xf]
  %v74 = vld [vmem:[%s1 + $0xac] sm:$0xf]
  %v75 = vld [vmem:[%s1 + $0xb0] sm:$0xf]
  %v76 = vld [vmem:[%s1 + $0xb4] sm:$0xf]
  %v77 = vld [vmem:[%s1 + $0xb8] sm:$0xf]
  %v78 = vld [vmem:[%s1 + $0xbc] sm:$0xf]
  %v79 = vld [vmem:[%s1 + $0xc0] sm:$0xf]
  %v80 = vld [vmem:[%s1 + $0xc4] sm:$0xf]
  %v81 = vld [vmem:[%s1 + $0xc8] sm:$0xf]
  %v82 = vld [vmem:[%s1 + $0xcc] sm:$0xf]
  %v83 = vld [vmem:[%s1 + $0xd0] sm:$0xf]
  %v84 = vld [vmem:[%s1 + $0xd4] sm:$0xf]
  %v85 = vld [vmem:[%s1 + $0xd8] sm:$0xf]
  %v86 = vld [vmem:[%s1 + $0xdc] sm:$0xf]
  %v87 = vld [vmem:[%s1 + $0xe0] sm:$0xf]
  %v88 = vld [vmem:[%s1 + $0xe4] sm:$0xf]
  %v89 = vld [vmem:[%s1 + $0xe8] sm:$0xf]
  %v90 = vld [vmem:[%s1 + $0xec] sm:$0xf]
  %v91 = vld [vmem:[%s1 + $0xf0] sm:$0xf]
  %v92 = vld [vmem:[%s1 + $0xf4] sm:$0xf]
  %v93 = vld [vmem:[%s1 + $0xf8] sm:$0xf]
  %v94 = vld [vmem:[%s1 + $0xfc] sm:$0xf]
  %v95 = vld [vmem:[%s1 + $0x100] sm:$0xf]
  %v96 = vld [vmem:[%s1 + $0x104] sm:$0xf]
  %v97 = vld [vmem:[%s1 + $0x108] sm:$0xf]
  %v98 = vld [vmem:[%s1 + $0x10c] sm:$0xf]
  %v99 = vld [vmem:[%s1 + $0x110] sm:$0xf]
  %v100 = vld [vmem:[%s1 + $0x114] sm:$0xf]
  %v101 = vld [vmem:[%s1 + $0x118] sm:$0xf]
  %v102 = vld [vmem:[%s1 + $0x11c] sm:$0xf]
  %v103 = vld [vmem:[%s1 + $0x120] sm:$0xf]
  %v104 = vld [vmem:[%s1 + $0x124] sm:$0xf]
  %v105 = vld [vmem:[%s1 + $0x128] sm:$0xf]
  %v106 = vld [vmem:[%s1 + $0x12c] sm:$0xf]
  %v107 = vld [vmem:[%s1 + $0x130] sm:$0xf]
  %v108 = vld [vmem:[%s1 + $0x134] sm:$0xf]
  %v109 = vld [vmem:[%s1 + $0x138] sm:$0xf]
  %v110 = vld [vmem:[%s1 + $0x13c] sm:$0xf]
  %v111 = vld [vmem:[%s1 + $0x140] sm:$0xf]
  %v112 = vld [vmem:[%s1 + $0x144] sm:$0xf]
  %v113 = vld [vmem:[%s1 + $0x148] sm:$0xf]
  %v114 = vld [vmem:[%s1 + $0x14c] sm:$0xf]
  %v115 = vld [vmem:[%s1 + $0x150] sm:$0xf]
  %v116 = vld [vmem:[%s1 + $0x154] sm:$0xf]
  %v117 = vld [vmem:[%s1 + $0x158] sm:$0xf]
  %v118 = vld [vmem:[%s1 + $0x15c] sm:$0xf]
  %v119 = vld [vmem:[%s1 + $0x160] sm:$0xf]
  %v120 = vld [vmem:[%s1 + $0x164] sm:$0xf]
  %v121 = vld [vmem:[%s1 + $0x168] sm:$0xf]
  %v122 = vld [vmem:[%s1 + $0x16c] sm:$0xf]
  %v123 = vld [vmem:[%s1 + $0x170] sm:$0xf]
  %v124 = vld [vmem:[%s1 + $0x174] sm:$0xf]
  %v125 = vld [vmem:[%s1 + $0x178] sm:$0xf]
  %v126 = vld [vmem:[%s1 + $0x17c] sm:$0xf]
  %v127 = vld [vmem:[%s1 + $0x180] sm:$0xf]
  %v128 = vld [vmem:[%s1 + $0x184] sm:$0xf]
  %v129 = vld [vmem:[%s2] sm:$0x1]
  %v131 = vlaneseq
  %v132 = vshrl.u32 %v131, 7
  %v133 = vsub.s32 0, %v132
  %v134 = vrot.slane %v129, %v133
  %v140 = vunpack.c.l.b16 %v27
  %v141 = vunpack.c.h.b16 %v27
  %v142 = vunpack.c.l.b16 %v28
  %v143 = vunpack.c.h.b16 %v28
  %v144 = vunpack.c.l.b16 %v29
  %v145 = vunpack.c.h.b16 %v29
  %v146 = vunpack.c.l.b16 %v30
  %v147 = vpack.c.b16 %v140, %v140
  %v148 = vpack.c.b16 %v141, %v141
  %v149 = vpack.c.b16 %v142, %v142
  %v150 = vpack.c.b16 %v143, %v143
  %v151 = vpack.c.b16 %v144, %v144
  %v152 = vpack.c.b16 %v145, %v145
  %v153 = vpack.c.b16 %v146, %v146
  %v258 = vunpack.c.l.b16 %v31
  %v259 = vunpack.c.l.b16 %v32
  %v260 = vunpack.c.l.b16 %v33
  %v261 = vunpack.c.l.b16 %v34
  %v262 = vunpack.c.l.b16 %v35
  %v263 = vunpack.c.l.b16 %v36
  %v264 = vunpack.c.l.b16 %v37
  %v265 = vunpack.c.l.b16 %v38
  %v266 = vunpack.c.l.b16 %v39
  %v267 = vunpack.c.l.b16 %v40
  %v268 = vunpack.c.l.b16 %v41
  %v269 = vunpack.c.l.b16 %v42
  %v270 = vunpack.c.l.b16 %v43
  %v271 = vunpack.c.l.b16 %v44
  %v272 = vunpack.c.l.b16 %v45
  %v273 = vunpack.c.l.b16 %v46
  %v274 = vunpack.c.l.b16 %v47
  %v275 = vunpack.c.l.b16 %v48
  %v276 = vunpack.c.l.b16 %v49
  %v277 = vunpack.c.l.b16 %v50
  %v278 = vunpack.c.l.b16 %v51
  %v279 = vunpack.c.l.b16 %v52
  %v280 = vunpack.c.l.b16 %v53
  %v281 = vunpack.c.l.b16 %v54
  %v282 = vunpack.c.l.b16 %v55
  %v283 = vunpack.c.l.b16 %v56
  %v284 = vunpack.c.l.b16 %v57
  %v285 = vunpack.c.l.b16 %v58
  %v286 = vunpack.c.l.b16 %v59
  %v287 = vunpack.c.l.b16 %v60
  %v288 = vunpack.c.l.b16 %v61
  %v289 = vunpack.c.l.b16 %v62
  %v290 = vunpack.c.l.b16 %v63
  %v291 = vunpack.c.l.b16 %v64
  %v292 = vunpack.c.l.b16 %v65
  %v293 = vunpack.c.l.b16 %v66
  %v294 = vunpack.c.l.b16 %v67
  %v295 = vunpack.c.l.b16 %v68
  %v296 = vunpack.c.l.b16 %v69
  %v297 = vunpack.c.l.b16 %v70
  %v298 = vunpack.c.l.b16 %v71
  %v299 = vunpack.c.l.b16 %v72
  %v300 = vunpack.c.l.b16 %v73
  %v301 = vunpack.c.l.b16 %v74
  %v302 = vunpack.c.l.b16 %v75
  %v303 = vunpack.c.l.b16 %v76
  %v304 = vunpack.c.l.b16 %v77
  %v305 = vunpack.c.l.b16 %v78
  %v306 = vunpack.c.l.b16 %v79
  %v307 = vunpack.c.l.b16 %v80
  %v308 = vunpack.c.l.b16 %v81
  %v309 = vunpack.c.l.b16 %v82
  %v310 = vunpack.c.l.b16 %v83
  %v311 = vunpack.c.l.b16 %v84
  %v312 = vunpack.c.l.b16 %v85
  %v313 = vunpack.c.l.b16 %v86
  %v314 = vunpack.c.l.b16 %v87
  %v315 = vunpack.c.l.b16 %v88
  %v316 = vunpack.c.l.b16 %v89
  %v317 = vunpack.c.l.b16 %v90
  %v318 = vunpack.c.l.b16 %v91
  %v319 = vunpack.c.l.b16 %v92
  %v320 = vunpack.c.l.b16 %v93
  %v321 = vunpack.c.l.b16 %v94
  %v322 = vunpack.c.l.b16 %v95
  %v323 = vunpack.c.l.b16 %v96
  %v324 = vunpack.c.l.b16 %v97
  %v325 = vunpack.c.l.b16 %v98
  %v326 = vunpack.c.l.b16 %v99
  %v327 = vunpack.c.l.b16 %v100
  %v328 = vunpack.c.l.b16 %v101
  %v329 = vunpack.c.l.b16 %v102
  %v330 = vunpack.c.l.b16 %v103
  %v331 = vunpack.c.l.b16 %v104
  %v332 = vunpack.c.l.b16 %v105
  %v333 = vunpack.c.l.b16 %v106
  %v334 = vunpack.c.l.b16 %v107
  %v335 = vunpack.c.l.b16 %v108
  %v336 = vunpack.c.l.b16 %v109
  %v337 = vunpack.c.l.b16 %v110
  %v338 = vunpack.c.l.b16 %v111
  %v339 = vunpack.c.l.b16 %v112
  %v340 = vunpack.c.l.b16 %v113
  %v341 = vunpack.c.l.b16 %v114
  %v342 = vunpack.c.l.b16 %v115
  %v343 = vunpack.c.l.b16 %v116
  %v344 = vunpack.c.l.b16 %v117
  %v345 = vunpack.c.l.b16 %v118
  %v346 = vunpack.c.l.b16 %v119
  %v347 = vunpack.c.l.b16 %v120
  %v348 = vunpack.c.l.b16 %v121
  %v349 = vunpack.c.l.b16 %v122
  %v350 = vunpack.c.l.b16 %v123
  %v351 = vunpack.c.l.b16 %v124
  %v352 = vunpack.c.l.b16 %v125
  %v353 = vunpack.c.l.b16 %v126
  %v354 = vunpack.c.l.b16 %v127
  %v355 = vunpack.c.l.b16 %v128
  %v356 = vpack.c.b16 %v259, %v258
  %v357 = vpack.c.b16 %v261, %v260
  %v358 = vpack.c.b16 %v263, %v262
  %v359 = vpack.c.b16 %v265, %v264
  %v360 = vpack.c.b16 %v267, %v266
  %v361 = vpack.c.b16 %v269, %v268
  %v362 = vpack.c.b16 %v271, %v270
  %v363 = vpack.c.b16 %v273, %v272
  %v364 = vpack.c.b16 %v275, %v274
  %v365 = vpack.c.b16 %v277, %v276
  %v366 = vpack.c.b16 %v279, %v278
  %v367 = vpack.c.b16 %v281, %v280
  %v368 = vpack.c.b16 %v283, %v282
  %v369 = vpack.c.b16 %v285, %v284
  %v370 = vpack.c.b16 %v287, %v286
  %v371 = vpack.c.b16 %v289, %v288
  %v372 = vpack.c.b16 %v291, %v290
  %v373 = vpack.c.b16 %v293, %v292
  %v374 = vpack.c.b16 %v295, %v294
  %v375 = vpack.c.b16 %v297, %v296
  %v376 = vpack.c.b16 %v299, %v298
  %v377 = vpack.c.b16 %v301, %v300
  %v378 = vpack.c.b16 %v303, %v302
  %v379 = vpack.c.b16 %v305, %v304
  %v380 = vpack.c.b16 %v307, %v306
  %v381 = vpack.c.b16 %v309, %v308
  %v382 = vpack.c.b16 %v311, %v310
  %v383 = vpack.c.b16 %v313, %v312
  %v384 = vpack.c.b16 %v315, %v314
  %v385 = vpack.c.b16 %v317, %v316
  %v386 = vpack.c.b16 %v319, %v318
  %v387 = vpack.c.b16 %v321, %v320
  %v388 = vpack.c.b16 %v323, %v322
  %v389 = vpack.c.b16 %v325, %v324
  %v390 = vpack.c.b16 %v327, %v326
  %v391 = vpack.c.b16 %v329, %v328
  %v392 = vpack.c.b16 %v331, %v330
  %v393 = vpack.c.b16 %v333, %v332
  %v394 = vpack.c.b16 %v335, %v334
  %v395 = vpack.c.b16 %v337, %v336
  %v396 = vpack.c.b16 %v339, %v338
  %v397 = vpack.c.b16 %v341, %v340
  %v398 = vpack.c.b16 %v343, %v342
  %v399 = vpack.c.b16 %v345, %v344
  %v400 = vpack.c.b16 %v347, %v346
  %v401 = vpack.c.b16 %v349, %v348
  %v402 = vpack.c.b16 %v351, %v350
  %v403 = vpack.c.b16 %v353, %v352
  %v404 = vpack.c.b16 %v355, %v354
  %vm454 = vcmask 130048
  %v456 = vsel %vm454, %v153, 0
  %458 = vmatprep.subr.bf16.mxu0 0
  %459 = vmatpush1.bf16.msra.mxu0 %v363
  %460 = vmatprep.subr.bf16.mxu0 0
  %461 = vmatpush1.bf16.msra.mxu0 %v362
  %462 = vmatprep.subr.bf16.mxu0 0
  %463 = vmatpush1.bf16.msra.mxu0 %v361
  %464 = vmatprep.subr.bf16.mxu0 0
  %465 = vmatpush1.bf16.msra.mxu0 %v360
  %466 = vmatprep.subr.bf16.mxu0 0
  %467 = vmatpush1.bf16.msra.mxu0 %v359
  %468 = vmatprep.subr.bf16.mxu0 0
  %469 = vmatpush1.bf16.msra.mxu0 %v358
  %470 = vmatprep.subr.bf16.mxu0 0
  %471 = vmatpush1.bf16.msra.mxu0 %v357
  %472 = vmatprep.subr.bf16.mxu0 0
  %473 = vmatpush1.bf16.msra.mxu0 %v356
  %474 = vmatprep.subr.bf16.mxu0 0
  %475 = vmatpush2.bf16.msra.mxu0 %v371
  %476 = vmatprep.subr.bf16.mxu0 0
  %477 = vmatpush2.bf16.msra.mxu0 %v370
  %478 = vmatprep.subr.bf16.mxu0 0
  %479 = vmatpush2.bf16.msra.mxu0 %v369
  %480 = vmatprep.subr.bf16.mxu0 0
  %481 = vmatpush2.bf16.msra.mxu0 %v368
  %482 = vmatprep.subr.bf16.mxu0 0
  %483 = vmatpush2.bf16.msra.mxu0 %v367
  %484 = vmatprep.subr.bf16.mxu0 0
  %485 = vmatpush2.bf16.msra.mxu0 %v366
  %486 = vmatprep.subr.bf16.mxu0 0
  %487 = vmatpush2.bf16.msra.mxu0 %v365
  %488 = vmatprep.subr.bf16.mxu0 0
  %489 = vmatpush2.bf16.msra.mxu0 %v364
  %490 = vmatprep.mubr.bf16.mxu0 %v148
  %491 = vmatmul.mubr.bf16.gmra.mxu0 %v147
  %v492 = vpop.f32.mrf.mxu0
  %v493 = vadd.f32 %v134, %v492
  %v494 = vpop.f32.mrf.mxu0
  %v495 = vpop.f32.mrf.mxu0
  %v496 = vpop.f32.mrf.mxu0
  %497 = vdwg.mxu0
  %498 = vmatprep.subr.bf16.mxu0 0
  %499 = vmatpush1.bf16.msra.mxu0 %v379
  %500 = vmatprep.subr.bf16.mxu0 0
  %501 = vmatpush1.bf16.msra.mxu0 %v378
  %502 = vmatprep.subr.bf16.mxu0 0
  %503 = vmatpush1.bf16.msra.mxu0 %v377
  %504 = vmatprep.subr.bf16.mxu0 0
  %505 = vmatpush1.bf16.msra.mxu0 %v376
  %506 = vmatprep.subr.bf16.mxu0 0
  %507 = vmatpush1.bf16.msra.mxu0 %v375
  %508 = vmatprep.subr.bf16.mxu0 0
  %509 = vmatpush1.bf16.msra.mxu0 %v374
  %510 = vmatprep.subr.bf16.mxu0 0
  %511 = vmatpush1.bf16.msra.mxu0 %v373
  %512 = vmatprep.subr.bf16.mxu0 0
  %513 = vmatpush1.bf16.msra.mxu0 %v372
  %514 = vmatprep.subr.bf16.mxu0 0
  %515 = vmatpush2.bf16.msra.mxu0 %v387
  %516 = vmatprep.subr.bf16.mxu0 0
  %517 = vmatpush2.bf16.msra.mxu0 %v386
  %518 = vmatprep.subr.bf16.mxu0 0
  %519 = vmatpush2.bf16.msra.mxu0 %v385
  %520 = vmatprep.subr.bf16.mxu0 0
  %521 = vmatpush2.bf16.msra.mxu0 %v384
  %522 = vmatprep.subr.bf16.mxu0 0
  %523 = vmatpush2.bf16.msra.mxu0 %v383
  %524 = vmatprep.subr.bf16.mxu0 0
  %525 = vmatpush2.bf16.msra.mxu0 %v382
  %526 = vmatprep.subr.bf16.mxu0 0
  %527 = vmatpush2.bf16.msra.mxu0 %v381
  %528 = vmatprep.subr.bf16.mxu0 0
  %529 = vmatpush2.bf16.msra.mxu0 %v380
  %530 = vmatprep.mubr.bf16.mxu0 %v150
  %531 = vmatmul.mubr.bf16.gmra.mxu0 %v149
  %v532 = vpop.f32.mrf.mxu0
  %v533 = vadd.f32 %v493, %v532
  %v534 = vpop.f32.mrf.mxu0
  %v535 = vpop.f32.mrf.mxu0
  %v536 = vpop.f32.mrf.mxu0
  %537 = vdwg.mxu0
  %538 = vmatprep.subr.bf16.mxu0 0
  %539 = vmatpush1.bf16.msra.mxu0 %v395
  %540 = vmatprep.subr.bf16.mxu0 0
  %541 = vmatpush1.bf16.msra.mxu0 %v394
  %542 = vmatprep.subr.bf16.mxu0 0
  %543 = vmatpush1.bf16.msra.mxu0 %v393
  %544 = vmatprep.subr.bf16.mxu0 0
  %545 = vmatpush1.bf16.msra.mxu0 %v392
  %546 = vmatprep.subr.bf16.mxu0 0
  %547 = vmatpush1.bf16.msra.mxu0 %v391
  %548 = vmatprep.subr.bf16.mxu0 0
  %549 = vmatpush1.bf16.msra.mxu0 %v390
  %550 = vmatprep.subr.bf16.mxu0 0
  %551 = vmatpush1.bf16.msra.mxu0 %v389
  %552 = vmatprep.subr.bf16.mxu0 0
  %553 = vmatpush1.bf16.msra.mxu0 %v388
  %554 = vmatprep.subr.bf16.mxu0 0
  %555 = vmatpush2.bf16.msra.mxu0 %v403
  %556 = vmatprep.subr.bf16.mxu0 0
  %557 = vmatpush2.bf16.msra.mxu0 %v402
  %558 = vmatprep.subr.bf16.mxu0 0
  %559 = vmatpush2.bf16.msra.mxu0 %v401
  %560 = vmatprep.subr.bf16.mxu0 0
  %561 = vmatpush2.bf16.msra.mxu0 %v400
  %562 = vmatprep.subr.bf16.mxu0 0
  %563 = vmatpush2.bf16.msra.mxu0 %v399
  %564 = vmatprep.subr.bf16.mxu0 0
  %565 = vmatpush2.bf16.msra.mxu0 %v398
  %566 = vmatprep.subr.bf16.mxu0 0
  %567 = vmatpush2.bf16.msra.mxu0 %v397
  %568 = vmatprep.subr.bf16.mxu0 0
  %569 = vmatpush2.bf16.msra.mxu0 %v396
  %570 = vmatprep.mubr.bf16.mxu0 %v152
  %571 = vmatmul.mubr.bf16.gmra.mxu0 %v151
  %v572 = vpop.f32.mrf.mxu0
  %v573 = vadd.f32 %v533, %v572
  %v574 = vpop.f32.mrf.mxu0
  %v575 = vpop.f32.mrf.mxu0
  %v576 = vpop.f32.mrf.mxu0
  %577 = vdwg.mxu0
  %578 = vmatprep.subr.bf16.mxu0 0
  %579 = vmatpush1.bf16.msra.mxu0 0
  %580 = vmatprep.subr.bf16.mxu0 0
  %581 = vmatpush1.bf16.msra.mxu0 0
  %582 = vmatprep.subr.bf16.mxu0 0
  %583 = vmatpush1.bf16.msra.mxu0 0
  %584 = vmatprep.subr.bf16.mxu0 0
  %585 = vmatpush1.bf16.msra.mxu0 0
  %586 = vmatprep.subr.bf16.mxu0 0
  %587 = vmatpush1.bf16.msra.mxu0 0
  %588 = vmatprep.subr.bf16.mxu0 0
  %589 = vmatpush1.bf16.msra.mxu0 0
  %590 = vmatprep.subr.bf16.mxu0 0
  %591 = vmatpush1.bf16.msra.mxu0 0
  %592 = vmatprep.subr.bf16.mxu0 0
  %593 = vmatpush1.bf16.msra.mxu0 %v404
  %594 = vmatprep.subr.bf16.mxu0 0
  %595 = vmatpush2.bf16.msra.mxu0 0
  %596 = vmatprep.subr.bf16.mxu0 0
  %597 = vmatpush2.bf16.msra.mxu0 0
  %598 = vmatprep.subr.bf16.mxu0 0
  %599 = vmatpush2.bf16.msra.mxu0 0
  %600 = vmatprep.subr.bf16.mxu0 0
  %601 = vmatpush2.bf16.msra.mxu0 0
  %602 = vmatprep.subr.bf16.mxu0 0
  %603 = vmatpush2.bf16.msra.mxu0 0
  %604 = vmatprep.subr.bf16.mxu0 0
  %605 = vmatpush2.bf16.msra.mxu0 0
  %606 = vmatprep.subr.bf16.mxu0 0
  %607 = vmatpush2.bf16.msra.mxu0 0
  %608 = vmatprep.subr.bf16.mxu0 0
  %609 = vmatpush2.bf16.msra.mxu0 0
  %610 = vmatprep.mubr.bf16.mxu0 0
  %611 = vmatmul.mubr.bf16.gmra.mxu0 %v456
  %v612 = vpop.f32.mrf.mxu0
  %v613 = vadd.f32 %v573, %v612
  %v614 = vpop.f32.mrf.mxu0
  %v615 = vpop.f32.mrf.mxu0
  %v616 = vpop.f32.mrf.mxu0
  %617 = vdwg.mxu0
  %v618 = vmax.f32 %v613, 0.0
  %v619 = vpack.c.bf16 %v618, %v618
  %v620 = vld [vmem:[%s3] sm:$0xf]
  %v621 = vld [vmem:[%s3 + $0x4] sm:$0xf]
  %v622 = vld [vmem:[%s3 + $0x8] sm:$0xf]
  %v623 = vld [vmem:[%s3 + $0xc] sm:$0xf]
  %v624 = vld [vmem:[%s3 + $0x10] sm:$0xf]
  %v625 = vld [vmem:[%s3 + $0x14] sm:$0xf]
  %v626 = vld [vmem:[%s3 + $0x18] sm:$0xf]
  %v627 = vld [vmem:[%s3 + $0x1c] sm:$0xf]
  %v628 = vld [vmem:[%s3 + $0x20] sm:$0xf]
  %v629 = vld [vmem:[%s3 + $0x24] sm:$0xf]
  %v630 = vld [vmem:[%s3 + $0x28] sm:$0xf]
  %v631 = vld [vmem:[%s3 + $0x2c] sm:$0xf]
  %v632 = vld [vmem:[%s3 + $0x30] sm:$0xf]
  %v633 = vld [vmem:[%s3 + $0x34] sm:$0xf]
  %v634 = vld [vmem:[%s3 + $0x38] sm:$0xf]
  %v635 = vld [vmem:[%s3 + $0x3c] sm:$0xf]
  %v636 = vld [vmem:[%s4] sm:$0x1]
  %v638 = vlaneseq
  %v639 = vshrl.u32 %v638, 7
  %v640 = vsub.s32 0, %v639
  %v641 = vrot.slane %v636, %v640
  %v659 = vunpack.c.l.b16 %v620
  %v660 = vunpack.c.l.b16 %v621
  %v661 = vunpack.c.l.b16 %v622
  %v662 = vunpack.c.l.b16 %v623
  %v663 = vunpack.c.l.b16 %v624
  %v664 = vunpack.c.l.b16 %v625
  %v665 = vunpack.c.l.b16 %v626
  %v666 = vunpack.c.l.b16 %v627
  %v667 = vunpack.c.l.b16 %v628
  %v668 = vunpack.c.l.b16 %v629
  %v669 = vunpack.c.l.b16 %v630
  %v670 = vunpack.c.l.b16 %v631
  %v671 = vunpack.c.l.b16 %v632
  %v672 = vunpack.c.l.b16 %v633
  %v673 = vunpack.c.l.b16 %v634
  %v674 = vunpack.c.l.b16 %v635
  %v675 = vpack.c.b16 %v660, %v659
  %v676 = vpack.c.b16 %v662, %v661
  %v677 = vpack.c.b16 %v664, %v663
  %v678 = vpack.c.b16 %v666, %v665
  %v679 = vpack.c.b16 %v668, %v667
  %v680 = vpack.c.b16 %v670, %v669
  %v681 = vpack.c.b16 %v672, %v671
  %v682 = vpack.c.b16 %v674, %v673
  %691 = vmatprep.subr.bf16.mxu0 0
  %692 = vmatpush1.bf16.msra.mxu0 %v682
  %693 = vmatprep.subr.bf16.mxu0 0
  %694 = vmatpush1.bf16.msra.mxu0 %v681
  %695 = vmatprep.subr.bf16.mxu0 0
  %696 = vmatpush1.bf16.msra.mxu0 %v680
  %697 = vmatprep.subr.bf16.mxu0 0
  %698 = vmatpush1.bf16.msra.mxu0 %v679
  %699 = vmatprep.subr.bf16.mxu0 0
  %700 = vmatpush1.bf16.msra.mxu0 %v678
  %701 = vmatprep.subr.bf16.mxu0 0
  %702 = vmatpush1.bf16.msra.mxu0 %v677
  %703 = vmatprep.subr.bf16.mxu0 0
  %704 = vmatpush1.bf16.msra.mxu0 %v676
  %705 = vmatprep.subr.bf16.mxu0 0
  %706 = vmatpush1.bf16.msra.mxu0 %v675
  %707 = vmatprep.subr.bf16.mxu0 0
  %708 = vmatpush2.bf16.msra.mxu0 0
  %709 = vmatprep.subr.bf16.mxu0 0
  %710 = vmatpush2.bf16.msra.mxu0 0
  %711 = vmatprep.subr.bf16.mxu0 0
  %712 = vmatpush2.bf16.msra.mxu0 0
  %713 = vmatprep.subr.bf16.mxu0 0
  %714 = vmatpush2.bf16.msra.mxu0 0
  %715 = vmatprep.subr.bf16.mxu0 0
  %716 = vmatpush2.bf16.msra.mxu0 0
  %717 = vmatprep.subr.bf16.mxu0 0
  %718 = vmatpush2.bf16.msra.mxu0 0
  %719 = vmatprep.subr.bf16.mxu0 0
  %720 = vmatpush2.bf16.msra.mxu0 0
  %721 = vmatprep.subr.bf16.mxu0 0
  %722 = vmatpush2.bf16.msra.mxu0 0
  %723 = vmatprep.mubr.bf16.mxu0 0
  %724 = vmatmul.mubr.bf16.gmra.mxu0 %v619
  %v725 = vpop.f32.mrf.mxu0
  %v726 = vadd.f32 %v641, %v725
  %v727 = vpop.f32.mrf.mxu0
  %v728 = vpop.f32.mrf.mxu0
  %v729 = vpop.f32.mrf.mxu0
  %730 = vdwg.mxu0
  %v731 = vmax.f32 %v726, 0.0
  %v732 = vpack.c.bf16 %v731, %v731
  %v733 = vld [vmem:[%s5] sm:$0xf]
  %v734 = vld [vmem:[%s5 + $0x4] sm:$0xf]
  %v735 = vld [vmem:[%s5 + $0x8] sm:$0xf]
  %v736 = vld [vmem:[%s5 + $0xc] sm:$0xf]
  %v737 = vld [vmem:[%s5 + $0x10] sm:$0xf]
  %v738 = vld [vmem:[%s5 + $0x14] sm:$0xf]
  %v739 = vld [vmem:[%s5 + $0x18] sm:$0xf]
  %v740 = vld [vmem:[%s5 + $0x1c] sm:$0xf]
  %v741 = vld [vmem:[%s6] sm:$0x1]
  %v743 = vlaneseq
  %v744 = vshrl.u32 %v743, 7
  %v745 = vsub.s32 0, %v744
  %v746 = vrot.slane %v741, %v745
  %v756 = vunpack.c.l.b16 %v733
  %v757 = vunpack.c.l.b16 %v734
  %v758 = vunpack.c.l.b16 %v735
  %v759 = vunpack.c.l.b16 %v736
  %v760 = vunpack.c.l.b16 %v737
  %v761 = vunpack.c.l.b16 %v738
  %v762 = vunpack.c.l.b16 %v739
  %v763 = vunpack.c.l.b16 %v740
  %v764 = vpack.c.b16 %v757, %v756
  %v765 = vpack.c.b16 %v759, %v758
  %v766 = vpack.c.b16 %v761, %v760
  %v767 = vpack.c.b16 %v763, %v762
  %vm772 = vcmask 523264
  %v774 = vsel %vm772, %v732, 0
  %776 = vmatprep.subr.bf16.mxu0 0
  %777 = vmatpush1.bf16.msra.mxu0 0
  %778 = vmatprep.subr.bf16.mxu0 0
  %779 = vmatpush1.bf16.msra.mxu0 0
  %780 = vmatprep.subr.bf16.mxu0 0
  %781 = vmatpush1.bf16.msra.mxu0 0
  %782 = vmatprep.subr.bf16.mxu0 0
  %783 = vmatpush1.bf16.msra.mxu0 0
  %784 = vmatprep.subr.bf16.mxu0 0
  %785 = vmatpush1.bf16.msra.mxu0 %v767
  %786 = vmatprep.subr.bf16.mxu0 0
  %787 = vmatpush1.bf16.msra.mxu0 %v766
  %788 = vmatprep.subr.bf16.mxu0 0
  %789 = vmatpush1.bf16.msra.mxu0 %v765
  %790 = vmatprep.subr.bf16.mxu0 0
  %791 = vmatpush1.bf16.msra.mxu0 %v764
  %792 = vmatprep.subr.bf16.mxu0 0
  %793 = vmatpush2.bf16.msra.mxu0 0
  %794 = vmatprep.subr.bf16.mxu0 0
  %795 = vmatpush2.bf16.msra.mxu0 0
  %796 = vmatprep.subr.bf16.mxu0 0
  %797 = vmatpush2.bf16.msra.mxu0 0
  %798 = vmatprep.subr.bf16.mxu0 0
  %799 = vmatpush2.bf16.msra.mxu0 0
  %800 = vmatprep.subr.bf16.mxu0 0
  %801 = vmatpush2.bf16.msra.mxu0 0
  %802 = vmatprep.subr.bf16.mxu0 0
  %803 = vmatpush2.bf16.msra.mxu0 0
  %804 = vmatprep.subr.bf16.mxu0 0
  %805 = vmatpush2.bf16.msra.mxu0 0
  %806 = vmatprep.subr.bf16.mxu0 0
  %807 = vmatpush2.bf16.msra.mxu0 0
  %808 = vmatprep.mubr.bf16.mxu0 0
  %809 = vmatmul.mubr.bf16.gmra.mxu0 %v774
  %v810 = vpop.f32.mrf.mxu0
  %v811 = vadd.f32 %v746, %v810
  %v812 = vpop.f32.mrf.mxu0
  %v813 = vpop.f32.mrf.mxu0
  %v814 = vpop.f32.mrf.mxu0
  %815 = vdwg.mxu0
  %vm816 = vcmask 80896
  %817 = vst.msk [vmem:[%s7] sm:$0xff] %vm816, %v811
  // Predicated region
  $region30: #{mlp_forward.1} parent=0 // pred_check
    _
  $region31: #{mlp_forward.1} parent=0 // pred_check_branch
    %819 = sbr.rel (0) target = $region33
  $region32: #{mlp_forward.1} parent=0 // pred_region
    _
  $region33: #{mlp_forward.1} parent=0 // pred_fallthru
    _
  // Predicated region
  $region34: #{mlp_forward.1} parent=0 // pred_check
    _
  $region35: #{mlp_forward.1} parent=0 // pred_check_branch
    %821 = sbr.rel (0) target = $region37
  $region36: #{mlp_forward.1} parent=0 // pred_region
    _
  $region37: #{mlp_forward.1} parent=0 // pred_fallthru
    _

</llo_original>
